<compile_context>
chip_gen: v7x
topology: tpu7x:2x2x1
jax: 0.10.0
libtpu: 0.0.40
codegen_flags: <defaults>
</compile_context>

<pallas_src>
import functools

import jax
import jax.numpy as jnp
from jax import lax
from jax.experimental import pallas as pl
from jax.experimental.pallas import tpu as pltpu

_LANE = 128


def _mlp_kernel(eps,
                x_ref,
                w1_ref, p1_ref,
                w2_ref, p2_ref,
                w3_ref, b3_ref,
                o_ref):
    def linear_ln_relu(h_in, w_ref, p_ref):
        # bf16 operands into the MXU, f32 accumulation.
        h = jnp.dot(h_in.astype(w_ref.dtype), w_ref[...],
                    preferred_element_type=jnp.float32)
        h = h + p_ref[0:1, :]                       # bias
        # LayerNorm (biased variance). Two-pass form (mean, then (h-mu)^2):
        # robust when |mean| >> std, unlike E[h^2]-E[h]^2.
        mu = jnp.mean(h, axis=-1, keepdims=True)
        d = h - mu
        var = jnp.mean(d * d, axis=-1, keepdims=True)
        h = d * lax.rsqrt(var + eps)
        h = h * p_ref[1:2, :] + p_ref[2:3, :]       # gamma, beta
        return jnp.maximum(h, 0.0)                  # ReLU

    # scale_ob is folded into W1, so the input tile goes straight from the
    # caller dtype to the matmul dtype (no f32 intermediate / multiply pass).
    h1 = linear_ln_relu(x_ref[...], w1_ref, p1_ref)
    h2 = linear_ln_relu(h1, w2_ref, p2_ref)

    out = jnp.dot(h2.astype(w3_ref.dtype), w3_ref[...],
                  preferred_element_type=jnp.float32)
    out = out + b3_ref[...]
    o_ref[...] = out.astype(o_ref.dtype)


def _choose_tile_rows(rows, tile_rows, dtype):
    """Row tile: multiple of the sublane granule for `dtype`, capped at
    `tile_rows`, aiming for an *even* grid-step count when the work is big
    enough so both v7x TensorCores get equal shares (no effect on v5e/v6e)."""
    bits = jnp.dtype(dtype).itemsize * 8
    g = max(8, 256 // bits)                       # f32 -> 8, bf16 -> 16, u8 -> 32
    cap = max(g, (int(tile_rows) // g) * g)
    rows_g = -(-rows // g) * g
    if rows_g <= 2 * g:                           # too small to split usefully
        return rows_g
    steps = max(2, -(-rows // cap))               # >= 2 steps (one per v7x TC)
    if steps % 2:
        steps += 1                                # even steps => balanced TCs
    per = -(-rows // steps)
    tile = -(-per // g) * g
    return max(g, min(tile, cap))


def fully_connected_nn(x, params, *, scale_ob=1.0, eps=1e-5, tile_rows=1024,
                       out_dtype=jnp.bfloat16):
    """x: (B, T, in_size) -> (B, T, out_size)."""
    B, T, in_size = x.shape
    w1, b1, g1, be1, w2, b2, g2, be2, w3, b3 = params
    h1_size = w1.shape[1]
    h2_size = w2.shape[1]
    out_size = w3.shape[1]

    rows = B * T
    # Keep the caller's dtype; any cast happens inside the kernel.
    x2d = x.reshape(rows, in_size)

    # --- parameter prep (tiny ops; constant-folded under jit) ---------------
    # Fold 1/scale_ob into W1: (x/s) @ W1 == x @ (W1/s), exact algebra.
    if float(scale_ob) != 1.0:
        w1 = (w1.astype(jnp.float32) * (1.0 / float(scale_ob))).astype(w1.dtype)
    # Pack per-layer (1,F) rows into one (3,F) operand: [bias; gamma; beta].
    p1 = jnp.concatenate([b1, g1, be1], axis=0)
    p2 = jnp.concatenate([b2, g2, be2], axis=0)
    # Lane-dense output: zero-pad the final projection to a multiple of 128.
    out_padded = -(-out_size // _LANE) * _LANE
    if out_padded != out_size:
        w3 = jnp.pad(w3, ((0, 0), (0, out_padded - out_size)))
        b3 = jnp.pad(b3, ((0, 0), (0, out_padded - out_size)))

    tile = _choose_tile_rows(rows, tile_rows, x2d.dtype)
    # No jnp.pad of x / no output row-slice: the pipeline masks the ragged
    # last block (garbage padded-read rows never get stored to valid rows).
    grid = (pl.cdiv(rows, tile),)

    def row_spec(feat):
        return pl.BlockSpec((tile, feat), lambda i: (i, 0))

    def full_spec(shape):
        # Grid-invariant operand (weights / packed LN params); DMA'd once.
        # On v7x with much wider layers, add pipeline_mode=pl.Buffered(1)
        # here to drop the redundant second VMEM buffer.
        return pl.BlockSpec(shape, lambda i: (0, 0))

    kernel = functools.partial(_mlp_kernel, float(eps))

    out2d = pl.pallas_call(
        kernel,
        out_shape=jax.ShapeDtypeStruct((rows, out_padded), out_dtype),
        grid_spec=pltpu.PrefetchScalarGridSpec(
            num_scalar_prefetch=0,
            grid=grid,
            in_specs=[
                row_spec(in_size),                    # x tile (caller dtype)
                full_spec((in_size, h1_size)),        # W1 (fan_in, fan_out), bf16
                full_spec((3, h1_size)),              # [b1; gamma1; beta1]
                full_spec((h1_size, h2_size)),        # W2, bf16
                full_spec((3, h2_size)),              # [b2; gamma2; beta2]
                full_spec((h2_size, out_padded)),     # W3, bf16 (lane-padded)
                full_spec((1, out_padded)),           # b3 (lane-padded)
            ],
            out_specs=row_spec(out_padded),
        ),
        compiler_params=pltpu.CompilerParams(
            dimension_semantics=("parallel",)),       # rows shard across v7x TCs
    )(x2d, w1, p1, w2, p2, w3, b3)

    if out_padded != out_size:
        out2d = out2d[:, :out_size]
    return out2d.reshape(B, T, out_size)


def init_params(key, in_size, hidden_sizes, out_size,
                weight_dtype=jnp.bfloat16):
    """Deterministic init mirroring tu.NormedLinear(scale=1.0) + nn.LayerNorm.

    Weights are stored bf16 (MXU-native), passed pre-transposed as
    (fan_in, fan_out); biases / LayerNorm gamma,beta stay f32 rows."""
    sizes = [in_size] + list(hidden_sizes) + [out_size]
    params = []
    for li, (fan_in, fan_out) in enumerate(zip(sizes[:-1], sizes[1:])):
        key, sub = jax.random.split(key)
        # torch weight is (out, in); normc-style: L2-normalize each output row.
        w = jax.random.normal(sub, (fan_out, fan_in), dtype=jnp.float32)
        w = w / jnp.linalg.norm(w, axis=1, keepdims=True)      # scale=1.0
        params.append(jnp.asarray(w.T, dtype=weight_dtype))    # (in, out)
        params.append(jnp.zeros((1, fan_out), jnp.float32))    # bias (zeroed)
        if li < len(hidden_sizes):                              # hidden layers get LN
            params.append(jnp.ones((1, fan_out), jnp.float32))     # gamma
            params.append(jnp.zeros((1, fan_out), jnp.float32))    # beta
    return params


def _reference(x, params, scale_ob=1.0, eps=1e-5):
    """Pure-JAX f32 reference with the same (bf16-stored) weight values."""
    w1, b1, g1, be1, w2, b2, g2, be2, w3, b3 = params
    B, T, _ = x.shape
    h = x.reshape(B * T, -1).astype(jnp.float32) / scale_ob
    for w, b, g, be in ((w1, b1, g1, be1), (w2, b2, g2, be2)):
        h = h @ w.astype(jnp.float32) + b
        mu = h.mean(-1, keepdims=True)
        var = ((h - mu) ** 2).mean(-1, keepdims=True)
        h = (h - mu) / jnp.sqrt(var + eps) * g + be
        h = jnp.maximum(h, 0.0)
    h = h @ w3.astype(jnp.float32) + b3
    return h.reshape(B, T, -1)


if __name__ == "__main__":
    in_size = 32
    hidden_sizes = (128, 128)
    out_size = 128
    scale_ob = 4.0          # exercised via the fold-into-W1 path (power of 2)

    key = jax.random.PRNGKey(0)
    key, xkey = jax.random.split(key)
    params = init_params(key, in_size, hidden_sizes, out_size)

    # Second case has rows % tile != 0 and exercises the ragged-last-block
    # path that replaced the wrapper-side pad/slice.
    for (B, T) in ((2, 8), (2, 9)):
        xkey, sub = jax.random.split(xkey)
        x = jax.random.normal(sub, (B, T, in_size), dtype=jnp.float32) * scale_ob

        out = jax.block_until_ready(
            fully_connected_nn(x, params, scale_ob=scale_ob))
        ref = _reference(x, params, scale_ob=scale_ob)

        assert out.shape == (B, T, out_size), out.shape
        out_f32 = out.astype(jnp.float32)
        # Tolerance covers bf16 rounding of matmul operands and the bf16
        # output store (accumulation / LN / ReLU are f32 in both paths).
        assert jnp.allclose(out_f32, ref, atol=5e-2, rtol=5e-2), (
            "mismatch vs reference, max abs err = %s"
            % float(jnp.max(jnp.abs(out_f32 - ref))))

    print("KERNEL_OK")
</pallas_src>

<mosaic_0001>
module attributes {stable_mosaic.version = 11 : i64} {
  func.func @_mlp_kernel(%arg0: i32, %arg1: memref<16x32xf32, #tpu.memory_space<vmem>>, %arg2: memref<32x128xbf16, #tpu.memory_space<vmem>>, %arg3: memref<3x128xf32, #tpu.memory_space<vmem>>, %arg4: memref<128x128xbf16, #tpu.memory_space<vmem>>, %arg5: memref<3x128xf32, #tpu.memory_space<vmem>>, %arg6: memref<128x128xbf16, #tpu.memory_space<vmem>>, %arg7: memref<1x128xf32, #tpu.memory_space<vmem>>, %arg8: memref<16x128xbf16, #tpu.memory_space<vmem>>) attributes {dimension_semantics = [#tpu.dimension_semantics<parallel>], iteration_bounds = array<i64: 1>, scalar_prefetch = 0 : i64, scratch_operands = 0 : i64, tpu.core_type = #tpu.core_type<tc>, window_params = [{transform_indices = @transform_0, window_bounds = array<i64: 16, 32>}, {pipeline_mode = #tpu.pipeline_mode<synchronous>, transform_indices = @transform_1, window_bounds = array<i64: 32, 128>}, {pipeline_mode = #tpu.pipeline_mode<synchronous>, transform_indices = @transform_2, window_bounds = array<i64: 3, 128>}, {pipeline_mode = #tpu.pipeline_mode<synchronous>, transform_indices = @transform_3, window_bounds = array<i64: 128, 128>}, {pipeline_mode = #tpu.pipeline_mode<synchronous>, transform_indices = @transform_4, window_bounds = array<i64: 3, 128>}, {pipeline_mode = #tpu.pipeline_mode<synchronous>, transform_indices = @transform_5, window_bounds = array<i64: 128, 128>}, {pipeline_mode = #tpu.pipeline_mode<synchronous>, transform_indices = @transform_6, window_bounds = array<i64: 1, 128>}, {transform_indices = @transform_7, window_bounds = array<i64: 16, 128>}]} {
    %c0 = arith.constant 0 : index
    %c0_0 = arith.constant 0 : index
    %0 = vector.load %arg1[%c0, %c0_0] : memref<16x32xf32, #tpu.memory_space<vmem>>, vector<16x32xf32>
    %1 = arith.truncf %0 : vector<16x32xf32> to vector<16x32xbf16>
    %c0_1 = arith.constant 0 : index
    %c0_2 = arith.constant 0 : index
    %2 = vector.load %arg2[%c0_1, %c0_2] : memref<32x128xbf16, #tpu.memory_space<vmem>>, vector<32x128xbf16>
    %cst = arith.constant dense<0.000000e+00> : vector<16x128xf32>
    %3 = tpu.matmul %1, %2, %cst {dimension_numbers = #tpu.dot_dimension_numbers<[1], [0], [0], [1], [0, 0, 1, 1], [], []>} : vector<16x32xbf16>, vector<32x128xbf16>, vector<16x128xf32> -> vector<16x128xf32>
    %c0_3 = arith.constant 0 : index
    %c0_4 = arith.constant 0 : index
    %4 = vector.load %arg3[%c0_3, %c0_4] : memref<3x128xf32, #tpu.memory_space<vmem>>, vector<1x128xf32>
    %5 = vector.broadcast %4 : vector<1x128xf32> to vector<16x128xf32>
    %6 = arith.addf %3, %5 : vector<16x128xf32>
    %cst_5 = arith.constant dense<0.000000e+00> : vector<16xf32>
    %7 = vector.multi_reduction <add>, %6, %cst_5 [1] : vector<16x128xf32> to vector<16xf32>
    %8 = vector.shape_cast %7 : vector<16xf32> to vector<16x1xf32>
    %cst_6 = arith.constant 1.280000e+02 : f32
    %9 = vector.broadcast %cst_6 : f32 to vector<16x1xf32>
    %10 = arith.divf %8, %9 : vector<16x1xf32>
    %11 = vector.broadcast %10 : vector<16x1xf32> to vector<16x128xf32>
    %12 = arith.subf %6, %11 : vector<16x128xf32>
    %13 = arith.mulf %12, %12 : vector<16x128xf32>
    %cst_7 = arith.constant dense<0.000000e+00> : vector<16xf32>
    %14 = vector.multi_reduction <add>, %13, %cst_7 [1] : vector<16x128xf32> to vector<16xf32>
    %15 = vector.shape_cast %14 : vector<16xf32> to vector<16x1xf32>
    %cst_8 = arith.constant 1.280000e+02 : f32
    %16 = vector.broadcast %cst_8 : f32 to vector<16x1xf32>
    %17 = arith.divf %15, %16 : vector<16x1xf32>
    %cst_9 = arith.constant 9.99999974E-6 : f32
    %18 = vector.broadcast %cst_9 : f32 to vector<16x1xf32>
    %19 = arith.addf %17, %18 : vector<16x1xf32>
    %20 = math.rsqrt %19 : vector<16x1xf32>
    %21 = vector.broadcast %20 : vector<16x1xf32> to vector<16x128xf32>
    %22 = arith.mulf %12, %21 : vector<16x128xf32>
    %c1 = arith.constant 1 : index
    %c0_10 = arith.constant 0 : index
    %23 = vector.load %arg3[%c1, %c0_10] : memref<3x128xf32, #tpu.memory_space<vmem>>, vector<1x128xf32>
    %24 = vector.broadcast %23 : vector<1x128xf32> to vector<16x128xf32>
    %25 = arith.mulf %22, %24 : vector<16x128xf32>
    %c2 = arith.constant 2 : index
    %c0_11 = arith.constant 0 : index
    %26 = vector.load %arg3[%c2, %c0_11] : memref<3x128xf32, #tpu.memory_space<vmem>>, vector<1x128xf32>
    %27 = vector.broadcast %26 : vector<1x128xf32> to vector<16x128xf32>
    %28 = arith.addf %25, %27 : vector<16x128xf32>
    %cst_12 = arith.constant 0.000000e+00 : f32
    %29 = vector.broadcast %cst_12 : f32 to vector<16x128xf32>
    %30 = arith.maximumf %28, %29 : vector<16x128xf32>
    %31 = arith.truncf %30 : vector<16x128xf32> to vector<16x128xbf16>
    %c0_13 = arith.constant 0 : index
    %c0_14 = arith.constant 0 : index
    %32 = vector.load %arg4[%c0_13, %c0_14] : memref<128x128xbf16, #tpu.memory_space<vmem>>, vector<128x128xbf16>
    %cst_15 = arith.constant dense<0.000000e+00> : vector<16x128xf32>
    %33 = tpu.matmul %31, %32, %cst_15 {dimension_numbers = #tpu.dot_dimension_numbers<[1], [0], [0], [1], [0, 0, 1, 1], [], []>} : vector<16x128xbf16>, vector<128x128xbf16>, vector<16x128xf32> -> vector<16x128xf32>
    %c0_16 = arith.constant 0 : index
    %c0_17 = arith.constant 0 : index
    %34 = vector.load %arg5[%c0_16, %c0_17] : memref<3x128xf32, #tpu.memory_space<vmem>>, vector<1x128xf32>
    %35 = vector.broadcast %34 : vector<1x128xf32> to vector<16x128xf32>
    %36 = arith.addf %33, %35 : vector<16x128xf32>
    %cst_18 = arith.constant dense<0.000000e+00> : vector<16xf32>
    %37 = vector.multi_reduction <add>, %36, %cst_18 [1] : vector<16x128xf32> to vector<16xf32>
    %38 = vector.shape_cast %37 : vector<16xf32> to vector<16x1xf32>
    %cst_19 = arith.constant 1.280000e+02 : f32
    %39 = vector.broadcast %cst_19 : f32 to vector<16x1xf32>
    %40 = arith.divf %38, %39 : vector<16x1xf32>
    %41 = vector.broadcast %40 : vector<16x1xf32> to vector<16x128xf32>
    %42 = arith.subf %36, %41 : vector<16x128xf32>
    %43 = arith.mulf %42, %42 : vector<16x128xf32>
    %cst_20 = arith.constant dense<0.000000e+00> : vector<16xf32>
    %44 = vector.multi_reduction <add>, %43, %cst_20 [1] : vector<16x128xf32> to vector<16xf32>
    %45 = vector.shape_cast %44 : vector<16xf32> to vector<16x1xf32>
    %cst_21 = arith.constant 1.280000e+02 : f32
    %46 = vector.broadcast %cst_21 : f32 to vector<16x1xf32>
    %47 = arith.divf %45, %46 : vector<16x1xf32>
    %cst_22 = arith.constant 9.99999974E-6 : f32
    %48 = vector.broadcast %cst_22 : f32 to vector<16x1xf32>
    %49 = arith.addf %47, %48 : vector<16x1xf32>
    %50 = math.rsqrt %49 : vector<16x1xf32>
    %51 = vector.broadcast %50 : vector<16x1xf32> to vector<16x128xf32>
    %52 = arith.mulf %42, %51 : vector<16x128xf32>
    %c1_23 = arith.constant 1 : index
    %c0_24 = arith.constant 0 : index
    %53 = vector.load %arg5[%c1_23, %c0_24] : memref<3x128xf32, #tpu.memory_space<vmem>>, vector<1x128xf32>
    %54 = vector.broadcast %53 : vector<1x128xf32> to vector<16x128xf32>
    %55 = arith.mulf %52, %54 : vector<16x128xf32>
    %c2_25 = arith.constant 2 : index
    %c0_26 = arith.constant 0 : index
    %56 = vector.load %arg5[%c2_25, %c0_26] : memref<3x128xf32, #tpu.memory_space<vmem>>, vector<1x128xf32>
    %57 = vector.broadcast %56 : vector<1x128xf32> to vector<16x128xf32>
    %58 = arith.addf %55, %57 : vector<16x128xf32>
    %cst_27 = arith.constant 0.000000e+00 : f32
    %59 = vector.broadcast %cst_27 : f32 to vector<16x128xf32>
    %60 = arith.maximumf %58, %59 : vector<16x128xf32>
    %61 = arith.truncf %60 : vector<16x128xf32> to vector<16x128xbf16>
    %c0_28 = arith.constant 0 : index
    %c0_29 = arith.constant 0 : index
    %62 = vector.load %arg6[%c0_28, %c0_29] : memref<128x128xbf16, #tpu.memory_space<vmem>>, vector<128x128xbf16>
    %cst_30 = arith.constant dense<0.000000e+00> : vector<16x128xf32>
    %63 = tpu.matmul %61, %62, %cst_30 {dimension_numbers = #tpu.dot_dimension_numbers<[1], [0], [0], [1], [0, 0, 1, 1], [], []>} : vector<16x128xbf16>, vector<128x128xbf16>, vector<16x128xf32> -> vector<16x128xf32>
    %c0_31 = arith.constant 0 : index
    %c0_32 = arith.constant 0 : index
    %64 = vector.load %arg7[%c0_31, %c0_32] : memref<1x128xf32, #tpu.memory_space<vmem>>, vector<1x128xf32>
    %65 = vector.broadcast %64 : vector<1x128xf32> to vector<16x128xf32>
    %66 = arith.addf %63, %65 : vector<16x128xf32>
    %67 = arith.truncf %66 : vector<16x128xf32> to vector<16x128xbf16>
    %c0_33 = arith.constant 0 : index
    %c0_34 = arith.constant 0 : index
    %68 = vector.load %arg8[%c0_33, %c0_34] : memref<16x128xbf16, #tpu.memory_space<vmem>>, vector<16x128xbf16>
    tpu.vector_store %arg8[%c0_33, %c0_34], %67 {strides = array<i32>} : memref<16x128xbf16, #tpu.memory_space<vmem>>, vector<16x128xbf16>,
    return
  }
  func.func @transform_0(%arg0: i32) -> (i32, i32) {
    %c0_i32 = arith.constant 0 : i32
    %c0_i32_0 = arith.constant 0 : i32
    return %arg0, %c0_i32 : i32, i32
  }
  func.func @transform_1(%arg0: i32) -> (i32, i32) {
    %c0_i32 = arith.constant 0 : i32
    %c0_i32_0 = arith.constant 0 : i32
    %c0_i32_1 = arith.constant 0 : i32
    return %c0_i32, %c0_i32_0 : i32, i32
  }
  func.func @transform_2(%arg0: i32) -> (i32, i32) {
    %c0_i32 = arith.constant 0 : i32
    %c0_i32_0 = arith.constant 0 : i32
    %c0_i32_1 = arith.constant 0 : i32
    return %c0_i32, %c0_i32_0 : i32, i32
  }
  func.func @transform_3(%arg0: i32) -> (i32, i32) {
    %c0_i32 = arith.constant 0 : i32
    %c0_i32_0 = arith.constant 0 : i32
    %c0_i32_1 = arith.constant 0 : i32
    return %c0_i32, %c0_i32_0 : i32, i32
  }
  func.func @transform_4(%arg0: i32) -> (i32, i32) {
    %c0_i32 = arith.constant 0 : i32
    %c0_i32_0 = arith.constant 0 : i32
    %c0_i32_1 = arith.constant 0 : i32
    return %c0_i32, %c0_i32_0 : i32, i32
  }
  func.func @transform_5(%arg0: i32) -> (i32, i32) {
    %c0_i32 = arith.constant 0 : i32
    %c0_i32_0 = arith.constant 0 : i32
    %c0_i32_1 = arith.constant 0 : i32
    return %c0_i32, %c0_i32_0 : i32, i32
  }
  func.func @transform_6(%arg0: i32) -> (i32, i32) {
    %c0_i32 = arith.constant 0 : i32
    %c0_i32_0 = arith.constant 0 : i32
    %c0_i32_1 = arith.constant 0 : i32
    return %c0_i32, %c0_i32_0 : i32, i32
  }
  func.func @transform_7(%arg0: i32) -> (i32, i32) {
    %c0_i32 = arith.constant 0 : i32
    %c0_i32_0 = arith.constant 0 : i32
    return %arg0, %c0_i32 : i32, i32
  }
}

</mosaic_0001>

<llo_original>
// kernel: tpu_custom_call.1
$region0: #{tpu_custom_call.1}
  #allocation0 [shape = 'u32[]', space=smem, size = 0x4, offset = 0x4, fixed_abs, tag = 'smem constant byte address 0x4 - core index']
  #allocation1 [shape = 'u32[144,128]{1,0:T(1,128)}', space=vmem, size = 0x12000, scoped, tag = 'internal scratch']
  %s0 = inlined_call_operand.hbm [shape: f32[16,32], index: 0, kind: input, shape index: {}]
  %s1 = inlined_call_operand.hbm [shape: bf16[32,128], index: 1, kind: input, shape index: {}]
  %s2 = inlined_call_operand.vmem [shape: f32[3,128], index: 2, kind: input, shape index: {}]
  %s3 = inlined_call_operand.hbm [shape: bf16[128,128], index: 3, kind: input, shape index: {}]
  %s4 = inlined_call_operand.vmem [shape: f32[3,128], index: 4, kind: input, shape index: {}]
  %s5 = inlined_call_operand.hbm [shape: bf16[128,128], index: 5, kind: input, shape index: {}]
  %s6 = inlined_call_operand.vmem [shape: f32[1,128], index: 6, kind: input, shape index: {}]
  %s7 = inlined_call_operand.hbm [shape: bf16[16,128], index: 7, kind: output, shape index: {}]
  %s8 = sld [smem:[#allocation0]]
  $region54: #{tpu_custom_call.1} parent=0
    _
  %s10 = ssub.s32 1, %s8
  %s11 = scalar_select 0, %s10, %s8
  $region1: #{tpu_custom_call.1} parent=0
    #allocation2 [shape = 'u8[8192]{0}', space=vmem, size = 0x2000, scoped, tag = 'input window, operand 0, single buffered']
    #allocation3 [shape = 's32[1]{0}', space=sflag, size = 0x4, scoped, tag = 'scoped memory for tpu_custom_call.1']
    #allocation4 [shape = 's32[1]{0}', space=sflag, size = 0x4, scoped, tag = 'scoped memory for tpu_custom_call.1']
    #allocation5 [shape = 'u8[8192]{0}', space=vmem, size = 0x2000, scoped, tag = 'input window, operand 1, single buffered']
    #allocation6 [shape = 's32[1]{0}', space=sflag, size = 0x4, scoped, tag = 'scoped memory for tpu_custom_call.1']
    #allocation7 [shape = 'u8[32768]{0}', space=vmem, size = 0x8000, scoped, tag = 'input window, operand 3, single buffered']
    #allocation8 [shape = 'u8[32768]{0}', space=vmem, size = 0x8000, scoped, tag = 'input window, operand 5, single buffered']
    #allocation9 [shape = 's32[1]{0}', space=sflag, size = 0x4, scoped, tag = 'scoped memory for tpu_custom_call.1']
    #allocation10 [shape = 'u8[4096]{0}', space=vmem, size = 0x1000, scoped, tag = 'output window, operand 0, single buffered']
    %12 = vsyncpa [#allocation3], 0
    %13 = vsyncpa [#allocation6], 0
    %14 = vsyncpa [#allocation9], 0
    %15 = vsyncpa [#allocation4], 0
    // Predicated region
    $region2: #{tpu_custom_call.1} parent=1 // pred_check
      _
    $region3: #{tpu_custom_call.1} parent=1 // pred_check_branch
      %17 = sbr.rel (0) target = $region5
    $region4: #{tpu_custom_call.1} parent=1 // pred_region
      %s19 = ssub.s32 256, 256
      %20 = vsyncadd [#allocation3], %s19
      %s21 = sshll.u32 [#allocation2], 4
      %s22 = int_to_ptr.vmem [resolvable:$true] %s21
      %27 = dma.hbm_to_vmem [thread:$0]  %s0, 256, %s22, [#allocation3], 128, 128, 8
    $region5: #{tpu_custom_call.1} parent=1 // pred_fallthru
      _
    // Predicated region
    $region6: #{tpu_custom_call.1} parent=1 // pred_check
      _
    $region7: #{tpu_custom_call.1} parent=1 // pred_check_branch
      %29 = sbr.rel (0) target = $region9
    $region8: #{tpu_custom_call.1} parent=1 // pred_region
      %s31 = ssub.s32 256, 256
      %32 = vsyncadd [#allocation6], %s31
      %s33 = sshll.u32 [#allocation5], 4
      %s34 = int_to_ptr.vmem [resolvable:$true] %s33
      %39 = dma.hbm_to_vmem [thread:$0]  %s1, 256, %s34, [#allocation6], 64, 64, 4
    $region9: #{tpu_custom_call.1} parent=1 // pred_fallthru
      _
    // Predicated region
    $region10: #{tpu_custom_call.1} parent=1 // pred_check
      _
    $region11: #{tpu_custom_call.1} parent=1 // pred_check_branch
      %41 = sbr.rel (0) target = $region13
    $region12: #{tpu_custom_call.1} parent=1 // pred_region
      _
    $region13: #{tpu_custom_call.1} parent=1 // pred_fallthru
      _
    // Predicated region
    $region14: #{tpu_custom_call.1} parent=1 // pred_check
      _
    $region15: #{tpu_custom_call.1} parent=1 // pred_check_branch
      %43 = sbr.rel (0) target = $region17
    $region16: #{tpu_custom_call.1} parent=1 // pred_region
      %s45 = ssub.s32 1024, 1024
      %46 = vsyncadd [#allocation6], %s45
      %s47 = sshll.u32 [#allocation7], 4
      %s48 = int_to_ptr.vmem [resolvable:$true] %s47
      %53 = dma.hbm_to_vmem [thread:$0]  %s3, 1024, %s48, [#allocation6], 64, 64, 4
    $region17: #{tpu_custom_call.1} parent=1 // pred_fallthru
      _
    // Predicated region
    $region18: #{tpu_custom_call.1} parent=1 // pred_check
      _
    $region19: #{tpu_custom_call.1} parent=1 // pred_check_branch
      %55 = sbr.rel (0) target = $region21
    $region20: #{tpu_custom_call.1} parent=1 // pred_region
      _
    $region21: #{tpu_custom_call.1} parent=1 // pred_fallthru
      _
    // Predicated region
    $region22: #{tpu_custom_call.1} parent=1 // pred_check
      _
    $region23: #{tpu_custom_call.1} parent=1 // pred_check_branch
      %57 = sbr.rel (0) target = $region25
    $region24: #{tpu_custom_call.1} parent=1 // pred_region
      %s59 = ssub.s32 1024, 1024
      %60 = vsyncadd [#allocation9], %s59
      %s61 = sshll.u32 [#allocation8], 4
      %s62 = int_to_ptr.vmem [resolvable:$true] %s61
      %67 = dma.hbm_to_vmem [thread:$0]  %s5, 1024, %s62, [#allocation9], 64, 64, 4
    $region25: #{tpu_custom_call.1} parent=1 // pred_fallthru
      _
    // Predicated region
    $region26: #{tpu_custom_call.1} parent=1 // pred_check
      _
    $region27: #{tpu_custom_call.1} parent=1 // pred_check_branch
      %69 = sbr.rel (0) target = $region29
    $region28: #{tpu_custom_call.1} parent=1 // pred_region
      _
    $region29: #{tpu_custom_call.1} parent=1 // pred_fallthru
      _
    // Predicated region
    $region30: #{tpu_custom_call.1} parent=1 // pred_check
      _
    $region31: #{tpu_custom_call.1} parent=1 // pred_check_branch
      %71 = sbr.rel (0) target = $region33
    $region32: #{tpu_custom_call.1} parent=1 // pred_region
      %72 = dma.done [#allocation3], 256
    $region33: #{tpu_custom_call.1} parent=1 // pred_fallthru
      _
    // Predicated region
    $region34: #{tpu_custom_call.1} parent=1 // pred_check
      _
    $region35: #{tpu_custom_call.1} parent=1 // pred_check_branch
      %74 = sbr.rel (0) target = $region37
    $region36: #{tpu_custom_call.1} parent=1 // pred_region
      %75 = dma.done [#allocation6], 256
    $region37: #{tpu_custom_call.1} parent=1 // pred_fallthru
      _
    // Predicated region
    $region38: #{tpu_custom_call.1} parent=1 // pred_check
      _
    $region39: #{tpu_custom_call.1} parent=1 // pred_check_branch
      %77 = sbr.rel (0) target = $region41
    $region40: #{tpu_custom_call.1} parent=1 // pred_region
      %78 = dma.done [#allocation6], 1024
    $region41: #{tpu_custom_call.1} parent=1 // pred_fallthru
      _
    // Predicated region
    $region42: #{tpu_custom_call.1} parent=1 // pred_check
      _
    $region43: #{tpu_custom_call.1} parent=1 // pred_check_branch
      %80 = sbr.rel (0) target = $region45
    $region44: #{tpu_custom_call.1} parent=1 // pred_region
      %81 = dma.done [#allocation9], 1024
    $region45: #{tpu_custom_call.1} parent=1 // pred_fallthru
      _
    %v83 = vld [vmem:[#allocation2] sm:$0xff]
    %v84 = vld [vmem:[#allocation2 + $0x8] sm:$0xff]
    %v85 = vpack.c.bf16 %v84, %v83
    %v86 = vld [vmem:[#allocation5] sm:$0xf]
    %v87 = vld [vmem:[#allocation5 + $0x4] sm:$0xf]
    %v88 = vld [vmem:[#allocation5 + $0x8] sm:$0xf]
    %v89 = vld [vmem:[#allocation5 + $0xc] sm:$0xf]
    %v90 = vld [vmem:[%s2] sm:$0x1]
    %v91 = vlaneseq
    %v92 = vshrl.u32 %v91, 7
    %v93 = vsub.s32 0, %v92
    %v94 = vrot.slane %v90, %v93
    %v99 = vunpack.c.l.b16 %v86
    %v100 = vunpack.c.l.b16 %v87
    %v101 = vunpack.c.l.b16 %v88
    %v102 = vunpack.c.l.b16 %v89
    %v103 = vpack.c.b16 %v100, %v99
    %v104 = vpack.c.b16 %v102, %v101
    %vm107 = vcmask 261120
    %v109 = vsel %vm107, %v85, 0
    %111 = vmatprep.subr.bf16.mxu0 0
    %112 = vmatpush1.bf16.msra.mxu0 %v103
    %113 = vmatprep.subr.bf16.mxu0 0
    %114 = vmatpush1.bf16.msra.mxu0 %v104
    %115 = vmatprep.subr.bf16.mxu0 0
    %116 = vmatpush1.bf16.msra.mxu0 0
    %117 = vmatprep.subr.bf16.mxu0 0
    %118 = vmatpush1.bf16.msra.mxu0 0
    %119 = vmatprep.subr.bf16.mxu0 0
    %120 = vmatpush1.bf16.msra.mxu0 0
    %121 = vmatprep.subr.bf16.mxu0 0
    %122 = vmatpush1.bf16.msra.mxu0 0
    %123 = vmatprep.subr.bf16.mxu0 0
    %124 = vmatpush1.bf16.msra.mxu0 0
    %125 = vmatprep.subr.bf16.mxu0 0
    %126 = vmatpush1.bf16.msra.mxu0 0
    %127 = vmatprep.subr.bf16.mxu0 0
    %128 = vmatpush1.bf16.msra.mxu0 0
    %129 = vmatprep.subr.bf16.mxu0 0
    %130 = vmatpush1.bf16.msra.mxu0 0
    %131 = vmatprep.subr.bf16.mxu0 0
    %132 = vmatpush1.bf16.msra.mxu0 0
    %133 = vmatprep.subr.bf16.mxu0 0
    %134 = vmatpush1.bf16.msra.mxu0 0
    %135 = vmatprep.subr.bf16.mxu0 0
    %136 = vmatpush1.bf16.msra.mxu0 0
    %137 = vmatprep.subr.bf16.mxu0 0
    %138 = vmatpush1.bf16.msra.mxu0 0
    %139 = vmatprep.subr.bf16.mxu0 0
    %140 = vmatpush1.bf16.msra.mxu0 0
    %141 = vmatprep.subr.bf16.mxu0 0
    %142 = vmatpush1.bf16.msra.mxu0 0
    %143 = vmatprep.mubr.bf16.mxu0 0
    %144 = vmatmul.mubr.bf16.gmra.mrb[0].mxu0 %v109
    %v145 = vpop.f32.mrb[0].mxu0
    %v146 = vadd.f32 %v94, %v145
    %v147 = vpop.f32.mrb[0].mxu0
    %v148 = vpop.f32.mrb[0].mxu0
    %v149 = vadd.f32 %v94, %v148
    %v150 = vpop.f32.mrb[0].mxu0
    %151 = vdwg.mxu0
    %152 = vadd.xlane.f32.xlu0 %v146
    %v153 = vpop.xlane.xlu0 %152
    %154 = vadd.xlane.f32.xlu0 %v149
    %v155 = vpop.xlane.xlu0 %154
    %v156 = vrcp.pop 128.0
    %v157 = vmul.f32 %v153, %v156
    %v158 = vmul.f32 %v155, %v156
    %v159 = vsub.f32 %v146, %v157
    %v160 = vsub.f32 %v149, %v158
    %v161 = vmul.f32 %v159, %v159
    %v162 = vmul.f32 %v160, %v160
    %163 = vadd.xlane.f32.xlu0 %v161
    %v164 = vpop.xlane.xlu0 %163
    %165 = vadd.xlane.f32.xlu0 %v162
    %v166 = vpop.xlane.xlu0 %165
    %v167 = vmul.f32 %v164, %v156
    %v168 = vmul.f32 %v166, %v156
    %v169 = vadd.f32 %v167, 1e-05
    %v170 = vadd.f32 %v168, 1e-05
    %v171 = vrsqrt.pop %v169
    %v172 = vrsqrt.pop %v170
    %v173 = vmul.f32 %v159, %v171
    %v174 = vmul.f32 %v160, %v172
    %v175 = vld [vmem:[%s2 + $0x1] sm:$0x1]
    %v176 = vlaneseq
    %v177 = vshrl.u32 %v176, 7
    %v178 = vsub.s32 0, %v177
    %v179 = vrot.slane %v175, %v178
    %v180 = vmul.f32 %v173, %v179
    %v181 = vmul.f32 %v174, %v179
    %v182 = vld [vmem:[%s2 + $0x2] sm:$0x1]
    %v183 = vlaneseq
    %v184 = vshrl.u32 %v183, 7
    %v185 = vsub.s32 0, %v184
    %v186 = vrot.slane %v182, %v185
    %v187 = vadd.f32 %v180, %v186
    %v188 = vadd.f32 %v181, %v186
    %v189 = vmax.f32 %v187, 0.0
    %v190 = vmax.f32 %v188, 0.0
    %v191 = vpack.c.bf16 %v190, %v189
    %v192 = vld [vmem:[#allocation7] sm:$0xf]
    %v193 = vld [vmem:[#allocation7 + $0x4] sm:$0xf]
    %v194 = vld [vmem:[#allocation7 + $0x8] sm:$0xf]
    %v195 = vld [vmem:[#allocation7 + $0xc] sm:$0xf]
    %v196 = vld [vmem:[#allocation7 + $0x10] sm:$0xf]
    %v197 = vld [vmem:[#allocation7 + $0x14] sm:$0xf]
    %v198 = vld [vmem:[#allocation7 + $0x18] sm:$0xf]
    %v199 = vld [vmem:[#allocation7 + $0x1c] sm:$0xf]
    %v200 = vld [vmem:[#allocation7 + $0x20] sm:$0xf]
    %v201 = vld [vmem:[#allocation7 + $0x24] sm:$0xf]
    %v202 = vld [vmem:[#allocation7 + $0x28] sm:$0xf]
    %v203 = vld [vmem:[#allocation7 + $0x2c] sm:$0xf]
    %v204 = vld [vmem:[#allocation7 + $0x30] sm:$0xf]
    %v205 = vld [vmem:[#allocation7 + $0x34] sm:$0xf]
    %v206 = vld [vmem:[#allocation7 + $0x38] sm:$0xf]
    %v207 = vld [vmem:[#allocation7 + $0x3c] sm:$0xf]
    %v208 = vld [vmem:[%s4] sm:$0x1]
    %v209 = vlaneseq
    %v210 = vshrl.u32 %v209, 7
    %v211 = vsub.s32 0, %v210
    %v212 = vrot.slane %v208, %v211
    %v229 = vunpack.c.l.b16 %v192
    %v230 = vunpack.c.l.b16 %v193
    %v231 = vunpack.c.l.b16 %v194
    %v232 = vunpack.c.l.b16 %v195
    %v233 = vunpack.c.l.b16 %v196
    %v234 = vunpack.c.l.b16 %v197
    %v235 = vunpack.c.l.b16 %v198
    %v236 = vunpack.c.l.b16 %v199
    %v237 = vunpack.c.l.b16 %v200
    %v238 = vunpack.c.l.b16 %v201
    %v239 = vunpack.c.l.b16 %v202
    %v240 = vunpack.c.l.b16 %v203
    %v241 = vunpack.c.l.b16 %v204
    %v242 = vunpack.c.l.b16 %v205
    %v243 = vunpack.c.l.b16 %v206
    %v244 = vunpack.c.l.b16 %v207
    %v245 = vpack.c.b16 %v230, %v229
    %v246 = vpack.c.b16 %v232, %v231
    %v247 = vpack.c.b16 %v234, %v233
    %v248 = vpack.c.b16 %v236, %v235
    %v249 = vpack.c.b16 %v238, %v237
    %v250 = vpack.c.b16 %v240, %v239
    %v251 = vpack.c.b16 %v242, %v241
    %v252 = vpack.c.b16 %v244, %v243
    %261 = vmatprep.subr.bf16.mxu0 0
    %262 = vmatpush1.bf16.msra.mxu0 %v245
    %263 = vmatprep.subr.bf16.mxu0 0
    %264 = vmatpush1.bf16.msra.mxu0 %v246
    %265 = vmatprep.subr.bf16.mxu0 0
    %266 = vmatpush1.bf16.msra.mxu0 %v247
    %267 = vmatprep.subr.bf16.mxu0 0
    %268 = vmatpush1.bf16.msra.mxu0 %v248
    %269 = vmatprep.subr.bf16.mxu0 0
    %270 = vmatpush1.bf16.msra.mxu0 %v249
    %271 = vmatprep.subr.bf16.mxu0 0
    %272 = vmatpush1.bf16.msra.mxu0 %v250
    %273 = vmatprep.subr.bf16.mxu0 0
    %274 = vmatpush1.bf16.msra.mxu0 %v251
    %275 = vmatprep.subr.bf16.mxu0 0
    %276 = vmatpush1.bf16.msra.mxu0 %v252
    %277 = vmatprep.subr.bf16.mxu0 0
    %278 = vmatpush1.bf16.msra.mxu0 0
    %279 = vmatprep.subr.bf16.mxu0 0
    %280 = vmatpush1.bf16.msra.mxu0 0
    %281 = vmatprep.subr.bf16.mxu0 0
    %282 = vmatpush1.bf16.msra.mxu0 0
    %283 = vmatprep.subr.bf16.mxu0 0
    %284 = vmatpush1.bf16.msra.mxu0 0
    %285 = vmatprep.subr.bf16.mxu0 0
    %286 = vmatpush1.bf16.msra.mxu0 0
    %287 = vmatprep.subr.bf16.mxu0 0
    %288 = vmatpush1.bf16.msra.mxu0 0
    %289 = vmatprep.subr.bf16.mxu0 0
    %290 = vmatpush1.bf16.msra.mxu0 0
    %291 = vmatprep.subr.bf16.mxu0 0
    %292 = vmatpush1.bf16.msra.mxu0 0
    %293 = vmatprep.mubr.bf16.mxu0 0
    %294 = vmatmul.mubr.bf16.gmra.mrb[0].mxu0 %v191
    %v295 = vpop.f32.mrb[0].mxu0
    %v296 = vadd.f32 %v212, %v295
    %v297 = vpop.f32.mrb[0].mxu0
    %v298 = vpop.f32.mrb[0].mxu0
    %v299 = vadd.f32 %v212, %v298
    %v300 = vpop.f32.mrb[0].mxu0
    %301 = vdwg.mxu0
    %302 = vadd.xlane.f32.xlu0 %v296
    %v303 = vpop.xlane.xlu0 %302
    %304 = vadd.xlane.f32.xlu0 %v299
    %v305 = vpop.xlane.xlu0 %304
    %v306 = vmul.f32 %v303, %v156
    %v307 = vmul.f32 %v305, %v156
    %v308 = vsub.f32 %v296, %v306
    %v309 = vsub.f32 %v299, %v307
    %v310 = vmul.f32 %v308, %v308
    %v311 = vmul.f32 %v309, %v309
    %312 = vadd.xlane.f32.xlu0 %v310
    %v313 = vpop.xlane.xlu0 %312
    %314 = vadd.xlane.f32.xlu0 %v311
    %v315 = vpop.xlane.xlu0 %314
    %v316 = vmul.f32 %v313, %v156
    %v317 = vmul.f32 %v315, %v156
    %v318 = vadd.f32 %v316, 1e-05
    %v319 = vadd.f32 %v317, 1e-05
    %v320 = vrsqrt.pop %v318
    %v321 = vrsqrt.pop %v319
    %v322 = vmul.f32 %v308, %v320
    %v323 = vmul.f32 %v309, %v321
    %v324 = vld [vmem:[%s4 + $0x1] sm:$0x1]
    %v325 = vlaneseq
    %v326 = vshrl.u32 %v325, 7
    %v327 = vsub.s32 0, %v326
    %v328 = vrot.slane %v324, %v327
    %v329 = vmul.f32 %v322, %v328
    %v330 = vmul.f32 %v323, %v328
    %v331 = vld [vmem:[%s4 + $0x2] sm:$0x1]
    %v332 = vlaneseq
    %v333 = vshrl.u32 %v332, 7
    %v334 = vsub.s32 0, %v333
    %v335 = vrot.slane %v331, %v334
    %v336 = vadd.f32 %v329, %v335
    %v337 = vadd.f32 %v330, %v335
    %v338 = vmax.f32 %v336, 0.0
    %v339 = vmax.f32 %v337, 0.0
    %v340 = vpack.c.bf16 %v339, %v338
    %v341 = vld [vmem:[#allocation8] sm:$0xf]
    %v342 = vld [vmem:[#allocation8 + $0x4] sm:$0xf]
    %v343 = vld [vmem:[#allocation8 + $0x8] sm:$0xf]
    %v344 = vld [vmem:[#allocation8 + $0xc] sm:$0xf]
    %v345 = vld [vmem:[#allocation8 + $0x10] sm:$0xf]
    %v346 = vld [vmem:[#allocation8 + $0x14] sm:$0xf]
    %v347 = vld [vmem:[#allocation8 + $0x18] sm:$0xf]
    %v348 = vld [vmem:[#allocation8 + $0x1c] sm:$0xf]
    %v349 = vld [vmem:[#allocation8 + $0x20] sm:$0xf]
    %v350 = vld [vmem:[#allocation8 + $0x24] sm:$0xf]
    %v351 = vld [vmem:[#allocation8 + $0x28] sm:$0xf]
    %v352 = vld [vmem:[#allocation8 + $0x2c] sm:$0xf]
    %v353 = vld [vmem:[#allocation8 + $0x30] sm:$0xf]
    %v354 = vld [vmem:[#allocation8 + $0x34] sm:$0xf]
    %v355 = vld [vmem:[#allocation8 + $0x38] sm:$0xf]
    %v356 = vld [vmem:[#allocation8 + $0x3c] sm:$0xf]
    %v357 = vld [vmem:[%s6] sm:$0x1]
    %v359 = vlaneseq
    %v360 = vshrl.u32 %v359, 7
    %v361 = vsub.s32 0, %v360
    %v362 = vrot.slane %v357, %v361
    %v380 = vunpack.c.l.b16 %v341
    %v381 = vunpack.c.l.b16 %v342
    %v382 = vunpack.c.l.b16 %v343
    %v383 = vunpack.c.l.b16 %v344
    %v384 = vunpack.c.l.b16 %v345
    %v385 = vunpack.c.l.b16 %v346
    %v386 = vunpack.c.l.b16 %v347
    %v387 = vunpack.c.l.b16 %v348
    %v388 = vunpack.c.l.b16 %v349
    %v389 = vunpack.c.l.b16 %v350
    %v390 = vunpack.c.l.b16 %v351
    %v391 = vunpack.c.l.b16 %v352
    %v392 = vunpack.c.l.b16 %v353
    %v393 = vunpack.c.l.b16 %v354
    %v394 = vunpack.c.l.b16 %v355
    %v395 = vunpack.c.l.b16 %v356
    %v396 = vpack.c.b16 %v381, %v380
    %v397 = vpack.c.b16 %v383, %v382
    %v398 = vpack.c.b16 %v385, %v384
    %v399 = vpack.c.b16 %v387, %v386
    %v400 = vpack.c.b16 %v389, %v388
    %v401 = vpack.c.b16 %v391, %v390
    %v402 = vpack.c.b16 %v393, %v392
    %v403 = vpack.c.b16 %v395, %v394
    %412 = vmatprep.subr.bf16.mxu0 0
    %413 = vmatpush1.bf16.msra.mxu0 %v396
    %414 = vmatprep.subr.bf16.mxu0 0
    %415 = vmatpush1.bf16.msra.mxu0 %v397
    %416 = vmatprep.subr.bf16.mxu0 0
    %417 = vmatpush1.bf16.msra.mxu0 %v398
    %418 = vmatprep.subr.bf16.mxu0 0
    %419 = vmatpush1.bf16.msra.mxu0 %v399
    %420 = vmatprep.subr.bf16.mxu0 0
    %421 = vmatpush1.bf16.msra.mxu0 %v400
    %422 = vmatprep.subr.bf16.mxu0 0
    %423 = vmatpush1.bf16.msra.mxu0 %v401
    %424 = vmatprep.subr.bf16.mxu0 0
    %425 = vmatpush1.bf16.msra.mxu0 %v402
    %426 = vmatprep.subr.bf16.mxu0 0
    %427 = vmatpush1.bf16.msra.mxu0 %v403
    %428 = vmatprep.subr.bf16.mxu0 0
    %429 = vmatpush1.bf16.msra.mxu0 0
    %430 = vmatprep.subr.bf16.mxu0 0
    %431 = vmatpush1.bf16.msra.mxu0 0
    %432 = vmatprep.subr.bf16.mxu0 0
    %433 = vmatpush1.bf16.msra.mxu0 0
    %434 = vmatprep.subr.bf16.mxu0 0
    %435 = vmatpush1.bf16.msra.mxu0 0
    %436 = vmatprep.subr.bf16.mxu0 0
    %437 = vmatpush1.bf16.msra.mxu0 0
    %438 = vmatprep.subr.bf16.mxu0 0
    %439 = vmatpush1.bf16.msra.mxu0 0
    %440 = vmatprep.subr.bf16.mxu0 0
    %441 = vmatpush1.bf16.msra.mxu0 0
    %442 = vmatprep.subr.bf16.mxu0 0
    %443 = vmatpush1.bf16.msra.mxu0 0
    %444 = vmatprep.mubr.bf16.mxu0 0
    %445 = vmatmul.mubr.bf16.gmra.mrb[0].mxu0 %v340
    %v446 = vpop.f32.mrb[0].mxu0
    %v447 = vadd.f32 %v362, %v446
    %v448 = vpop.f32.mrb[0].mxu0
    %v449 = vpop.f32.mrb[0].mxu0
    %v450 = vadd.f32 %v362, %v449
    %v451 = vpop.f32.mrb[0].mxu0
    %452 = vdwg.mxu0
    %v453 = vpack.c.bf16 %v450, %v447
    %v455 = vunpack.c.l.b16 %v453
    %v456 = vunpack.c.h.b16 %v453
    %v457 = vpack.c.b16 %v455, %v455
    %v458 = vpack.c.b16 %v456, %v456
    %461 = vst [vmem:[#allocation10] sm:$0xf] %v457
    %462 = vst [vmem:[#allocation10 + $0x4] sm:$0xf] %v458
    // Predicated region
    $region46: #{tpu_custom_call.1} parent=1 // pred_check
      _
    $region47: #{tpu_custom_call.1} parent=1 // pred_check_branch
      %464 = sbr.rel (0) target = $region49
    $region48: #{tpu_custom_call.1} parent=1 // pred_region
      %s466 = ssub.s32 128, 128
      %467 = vsyncadd [#allocation4], %s466
      %s468 = sshll.u32 [#allocation10], 4
      %s469 = int_to_ptr.vmem [resolvable:$true] %s468
      %474 = dma.vmem_to_hbm [thread:$0]  %s469, 128, %s7, [#allocation4], 64, 64, 4
    $region49: #{tpu_custom_call.1} parent=1 // pred_fallthru
      _
    // Predicated region
    $region50: #{tpu_custom_call.1} parent=1 // pred_check
      _
    $region51: #{tpu_custom_call.1} parent=1 // pred_check_branch
      %476 = sbr.rel (0) target = $region53
    $region52: #{tpu_custom_call.1} parent=1 // pred_region
      %477 = dma.done [#allocation4], 128
    $region53: #{tpu_custom_call.1} parent=1 // pred_fallthru
      _
    %478 = vsyncpa [#allocation3], 1
    %479 = vsyncpa [#allocation6], 1
    %480 = vsyncpa [#allocation9], 1
    %481 = vsyncpa [#allocation4], 1

</llo_original>
